<compile_context>
chip_gen: v7x
topology: tpu7x:2x2x1
jax: 0.10.0
libtpu: 0.0.40
codegen_flags: <defaults>
</compile_context>

<pallas_src>
import functools

import jax
import jax.numpy as jnp
from jax.experimental import pallas as pl
from jax.experimental.pallas import tpu as pltpu


def _round_up(n: int, m: int) -> int:
    return ((n + m - 1) // m) * m


def rnn_kernel(x_ref, wih_ref, whh_ref, b_ref, out_ref, *, seq_len, batch):
    """Single-invocation RNN forward, fully in vregs.

    Padded shapes:
      x_ref   : (TBp, Ip)   flattened (t, b) rows of the input
      wih_ref : (Ip, Hp)    W_ih^T, zero-padded
      whh_ref : (Hp, Hp)    W_hh^T, zero-padded
      b_ref   : (1,  Hp)    b_ih + b_hh, zero-padded
      out_ref : (TBp, Hp)   hidden states per (t, b) row
    """
    Hp = out_ref.shape[-1]

    # 1) Non-recurrent input projection for ALL timesteps as one MXU matmul,
    #    kept in vregs (a single 8x128 f32 tile at these sizes).
    xw = (
        jnp.dot(x_ref[...], wih_ref[...], preferred_element_type=jnp.float32)
        + b_ref[...]
    )

    # 2) Recurrent weight read once; resident for the whole loop.
    whh = whh_ref[...]
    # TODO(synk): keep W_hh^T stationary on the MXU across steps via
    # pltpu.matmul_push_rhs / matmul_acc_lhs / matmul_pop; kept as jnp.dot
    # here for lowering robustness.

    # 3) Sequential recurrence carried purely in vregs.  T is tiny and static,
    #    so a static Python loop fully unrolls; zero-padded hidden lanes stay 0
    #    (tanh(0) = 0), keeping the recurrence exact.
    h = jnp.zeros((batch, Hp), jnp.float32)  # torch.zeros h0
    rows = []
    for t in range(seq_len):
        pre = xw[t * batch:(t + 1) * batch, :] + jnp.dot(
            h, whh, preferred_element_type=jnp.float32
        )
        h = jnp.tanh(pre)
        rows.append(h)

    # 4) Single lane-dense, full-tile store of the whole output slab.
    pad_rows = out_ref.shape[0] - seq_len * batch
    if pad_rows:
        rows.append(jnp.zeros((pad_rows, Hp), jnp.float32))
    out_ref[...] = jnp.concatenate(rows, axis=0)


def pad_params(w_ih, w_hh, b_ih, b_hh):
    """Pad parameters to lane-dense shapes.  Call once per model."""
    H, I = w_ih.shape
    Ip = _round_up(I, 128)
    Hp = _round_up(H, 128)
    wih_pad = jnp.pad(w_ih.T.astype(jnp.float32), ((0, Ip - I), (0, Hp - H)))
    whh_pad = jnp.pad(w_hh.T.astype(jnp.float32), ((0, Hp - H), (0, Hp - H)))
    b_pad = jnp.pad(
        (b_ih + b_hh).astype(jnp.float32)[None, :], ((0, 0), (0, Hp - H))
    )
    return wih_pad, whh_pad, b_pad


@functools.partial(jax.jit, static_argnames=("hidden_size",))
def rnn_forward(x, wih_pad, whh_pad, b_pad, hidden_size):
    """x: (T, B, I) f32; padded params from pad_params().

    Returns (T*B, H) float32, matching `out.view(-1, hidden_size)`.
    """
    T, B, I = x.shape
    Ip, Hp = wih_pad.shape
    TBp = _round_up(T * B, 8)

    x2d = x.reshape(T * B, I).astype(jnp.float32)
    x_pad = jnp.pad(x2d, ((0, TBp - T * B), (0, Ip - I)))

    kernel = functools.partial(rnn_kernel, seq_len=T, batch=B)

    out_pad = pl.pallas_call(
        kernel,
        out_shape=jax.ShapeDtypeStruct((TBp, Hp), jnp.float32),
        # No grid: whole arrays live in VMEM for the single invocation
        # (no software pipeline, single-buffered weights).
        in_specs=[
            pl.BlockSpec(memory_space=pltpu.MemorySpace.VMEM),  # x (padded)
            pl.BlockSpec(memory_space=pltpu.MemorySpace.VMEM),  # W_ih^T
            pl.BlockSpec(memory_space=pltpu.MemorySpace.VMEM),  # W_hh^T
            pl.BlockSpec(memory_space=pltpu.MemorySpace.VMEM),  # fused bias
        ],
        out_specs=pl.BlockSpec(memory_space=pltpu.MemorySpace.VMEM),
    )(x_pad, wih_pad, whh_pad, b_pad)

    return out_pad[: T * B, :hidden_size]


def rnn_reference(x, w_ih, w_hh, b_ih, b_hh):
    """Pure-JAX reference matching torch.nn.RNN (tanh, num_layers=1)."""
    T, B, _ = x.shape
    H = w_ih.shape[0]
    h = jnp.zeros((B, H), jnp.float32)
    outs = []
    for t in range(T):
        h = jnp.tanh(x[t] @ w_ih.T + h @ w_hh.T + b_ih + b_hh)
        outs.append(h)
    return jnp.stack(outs).reshape(-1, H)


if __name__ == "__main__":
    # Module hyper-parameters (from the PyTorch script).
    input_size = 4
    hidden_size = 4
    batch_size = 1
    seq_len = 8

    key = jax.random.PRNGKey(0)
    kx, k1, k2, k3, k4 = jax.random.split(key, 5)

    # Deterministic parameter init, PyTorch-style U(-1/sqrt(H), 1/sqrt(H)).
    bound = 1.0 / jnp.sqrt(jnp.float32(hidden_size))
    w_ih = jax.random.uniform(k1, (hidden_size, input_size), jnp.float32, -bound, bound)
    w_hh = jax.random.uniform(k2, (hidden_size, hidden_size), jnp.float32, -bound, bound)
    b_ih = jax.random.uniform(k3, (hidden_size,), jnp.float32, -bound, bound)
    b_hh = jax.random.uniform(k4, (hidden_size,), jnp.float32, -bound, bound)

    # Input: (seq_len, batch, input_size), matching nn.RNN's default layout.
    x = jax.random.normal(kx, (seq_len, batch_size, input_size), jnp.float32)

    # Pad parameters once per model (steady-state: no per-call padding ops).
    wih_pad, whh_pad, b_pad = pad_params(w_ih, w_hh, b_ih, b_hh)

    out = rnn_forward(x, wih_pad, whh_pad, b_pad, hidden_size)
    out = jax.block_until_ready(out)

    ref = rnn_reference(x, w_ih, w_hh, b_ih, b_hh)
    assert out.shape == (seq_len * batch_size, hidden_size)
    assert jnp.allclose(out, ref, atol=1e-5, rtol=1e-5)

    print("KERNEL_OK")
</pallas_src>

<mosaic_0001>
module attributes {stable_mosaic.version = 11 : i64} {
  func.func @rnn_kernel(%arg0: memref<8x128xf32, #tpu.memory_space<vmem>>, %arg1: memref<128x128xf32, #tpu.memory_space<vmem>>, %arg2: memref<128x128xf32, #tpu.memory_space<vmem>>, %arg3: memref<1x128xf32, #tpu.memory_space<vmem>>, %arg4: memref<8x128xf32, #tpu.memory_space<vmem>>) attributes {dimension_semantics = [], scalar_prefetch = 0 : i64, scratch_operands = 0 : i64, tpu.core_type = #tpu.core_type<tc>} {
    %c0 = arith.constant 0 : index
    %c0_0 = arith.constant 0 : index
    %0 = vector.load %arg0[%c0, %c0_0] : memref<8x128xf32, #tpu.memory_space<vmem>>, vector<8x128xf32>
    %c0_1 = arith.constant 0 : index
    %c0_2 = arith.constant 0 : index
    %1 = vector.load %arg1[%c0_1, %c0_2] : memref<128x128xf32, #tpu.memory_space<vmem>>, vector<128x128xf32>
    %cst = arith.constant dense<0.000000e+00> : vector<8x128xf32>
    %2 = tpu.matmul %0, %1, %cst {dimension_numbers = #tpu.dot_dimension_numbers<[1], [0], [0], [1], [0, 0, 1, 1], [], []>} : vector<8x128xf32>, vector<128x128xf32>, vector<8x128xf32> -> vector<8x128xf32>
    %c0_3 = arith.constant 0 : index
    %c0_4 = arith.constant 0 : index
    %3 = vector.load %arg3[%c0_3, %c0_4] : memref<1x128xf32, #tpu.memory_space<vmem>>, vector<1x128xf32>
    %4 = vector.broadcast %3 : vector<1x128xf32> to vector<8x128xf32>
    %5 = arith.addf %2, %4 : vector<8x128xf32>
    %c0_5 = arith.constant 0 : index
    %c0_6 = arith.constant 0 : index
    %6 = vector.load %arg2[%c0_5, %c0_6] : memref<128x128xf32, #tpu.memory_space<vmem>>, vector<128x128xf32>
    %cst_7 = arith.constant 0.000000e+00 : f32
    %7 = vector.broadcast %cst_7 : f32 to vector<1x128xf32>
    %8 = vector.extract_strided_slice %5 {offsets = [0, 0], sizes = [1, 128], strides = [1, 1]} : vector<8x128xf32> to vector<1x128xf32>
    %cst_8 = arith.constant dense<0.000000e+00> : vector<1x128xf32>
    %9 = tpu.matmul %7, %6, %cst_8 {dimension_numbers = #tpu.dot_dimension_numbers<[1], [0], [0], [1], [0, 0, 1, 1], [], []>} : vector<1x128xf32>, vector<128x128xf32>, vector<1x128xf32> -> vector<1x128xf32>
    %10 = arith.addf %8, %9 : vector<1x128xf32>
    %11 = math.tanh %10 : vector<1x128xf32>
    %12 = vector.extract_strided_slice %5 {offsets = [1, 0], sizes = [1, 128], strides = [1, 1]} : vector<8x128xf32> to vector<1x128xf32>
    %cst_9 = arith.constant dense<0.000000e+00> : vector<1x128xf32>
    %13 = tpu.matmul %11, %6, %cst_9 {dimension_numbers = #tpu.dot_dimension_numbers<[1], [0], [0], [1], [0, 0, 1, 1], [], []>} : vector<1x128xf32>, vector<128x128xf32>, vector<1x128xf32> -> vector<1x128xf32>
    %14 = arith.addf %12, %13 : vector<1x128xf32>
    %15 = math.tanh %14 : vector<1x128xf32>
    %16 = vector.extract_strided_slice %5 {offsets = [2, 0], sizes = [1, 128], strides = [1, 1]} : vector<8x128xf32> to vector<1x128xf32>
    %cst_10 = arith.constant dense<0.000000e+00> : vector<1x128xf32>
    %17 = tpu.matmul %15, %6, %cst_10 {dimension_numbers = #tpu.dot_dimension_numbers<[1], [0], [0], [1], [0, 0, 1, 1], [], []>} : vector<1x128xf32>, vector<128x128xf32>, vector<1x128xf32> -> vector<1x128xf32>
    %18 = arith.addf %16, %17 : vector<1x128xf32>
    %19 = math.tanh %18 : vector<1x128xf32>
    %20 = vector.extract_strided_slice %5 {offsets = [3, 0], sizes = [1, 128], strides = [1, 1]} : vector<8x128xf32> to vector<1x128xf32>
    %cst_11 = arith.constant dense<0.000000e+00> : vector<1x128xf32>
    %21 = tpu.matmul %19, %6, %cst_11 {dimension_numbers = #tpu.dot_dimension_numbers<[1], [0], [0], [1], [0, 0, 1, 1], [], []>} : vector<1x128xf32>, vector<128x128xf32>, vector<1x128xf32> -> vector<1x128xf32>
    %22 = arith.addf %20, %21 : vector<1x128xf32>
    %23 = math.tanh %22 : vector<1x128xf32>
    %24 = vector.extract_strided_slice %5 {offsets = [4, 0], sizes = [1, 128], strides = [1, 1]} : vector<8x128xf32> to vector<1x128xf32>
    %cst_12 = arith.constant dense<0.000000e+00> : vector<1x128xf32>
    %25 = tpu.matmul %23, %6, %cst_12 {dimension_numbers = #tpu.dot_dimension_numbers<[1], [0], [0], [1], [0, 0, 1, 1], [], []>} : vector<1x128xf32>, vector<128x128xf32>, vector<1x128xf32> -> vector<1x128xf32>
    %26 = arith.addf %24, %25 : vector<1x128xf32>
    %27 = math.tanh %26 : vector<1x128xf32>
    %28 = vector.extract_strided_slice %5 {offsets = [5, 0], sizes = [1, 128], strides = [1, 1]} : vector<8x128xf32> to vector<1x128xf32>
    %cst_13 = arith.constant dense<0.000000e+00> : vector<1x128xf32>
    %29 = tpu.matmul %27, %6, %cst_13 {dimension_numbers = #tpu.dot_dimension_numbers<[1], [0], [0], [1], [0, 0, 1, 1], [], []>} : vector<1x128xf32>, vector<128x128xf32>, vector<1x128xf32> -> vector<1x128xf32>
    %30 = arith.addf %28, %29 : vector<1x128xf32>
    %31 = math.tanh %30 : vector<1x128xf32>
    %32 = vector.extract_strided_slice %5 {offsets = [6, 0], sizes = [1, 128], strides = [1, 1]} : vector<8x128xf32> to vector<1x128xf32>
    %cst_14 = arith.constant dense<0.000000e+00> : vector<1x128xf32>
    %33 = tpu.matmul %31, %6, %cst_14 {dimension_numbers = #tpu.dot_dimension_numbers<[1], [0], [0], [1], [0, 0, 1, 1], [], []>} : vector<1x128xf32>, vector<128x128xf32>, vector<1x128xf32> -> vector<1x128xf32>
    %34 = arith.addf %32, %33 : vector<1x128xf32>
    %35 = math.tanh %34 : vector<1x128xf32>
    %36 = vector.extract_strided_slice %5 {offsets = [7, 0], sizes = [1, 128], strides = [1, 1]} : vector<8x128xf32> to vector<1x128xf32>
    %cst_15 = arith.constant dense<0.000000e+00> : vector<1x128xf32>
    %37 = tpu.matmul %35, %6, %cst_15 {dimension_numbers = #tpu.dot_dimension_numbers<[1], [0], [0], [1], [0, 0, 1, 1], [], []>} : vector<1x128xf32>, vector<128x128xf32>, vector<1x128xf32> -> vector<1x128xf32>
    %38 = arith.addf %36, %37 : vector<1x128xf32>
    %39 = math.tanh %38 : vector<1x128xf32>
    %40 = tpu.concatenate %11, %15, %19, %23, %27, %31, %35, %39 in 0 : vector<1x128xf32>, vector<1x128xf32>, vector<1x128xf32>, vector<1x128xf32>, vector<1x128xf32>, vector<1x128xf32>, vector<1x128xf32>, vector<1x128xf32> -> vector<8x128xf32>
    %c0_16 = arith.constant 0 : index
    %c0_17 = arith.constant 0 : index
    %41 = vector.load %arg4[%c0_16, %c0_17] : memref<8x128xf32, #tpu.memory_space<vmem>>, vector<8x128xf32>
    tpu.vector_store %arg4[%c0_16, %c0_17], %40 {strides = array<i32>} : memref<8x128xf32, #tpu.memory_space<vmem>>, vector<8x128xf32>,
    return
  }
}

</mosaic_0001>

<llo_original>
// kernel: rnn_forward.1
$region0: #{rnn_forward.1}
  #allocation0 [shape = 'u32[]', space=smem, size = 0x4, offset = 0x4, fixed_abs, tag = 'smem constant byte address 0x4 - core index']
  #allocation1 [shape = 'u32[144,128]{1,0:T(1,128)}', space=vmem, size = 0x12000, scoped, tag = 'internal scratch']
  %s0 = inlined_call_operand.vmem [shape: f32[8,128], index: 0, kind: input, shape index: {}]
  %s1 = inlined_call_operand.hbm [shape: f32[128,128], index: 1, kind: input, shape index: {}]
  %s2 = inlined_call_operand.hbm [shape: f32[128,128], index: 2, kind: input, shape index: {}]
  %s3 = inlined_call_operand.vmem [shape: f32[1,128], index: 3, kind: input, shape index: {}]
  %s4 = inlined_call_operand.vmem [shape: f32[8,128], index: 4, kind: output, shape index: {}]
  %s5 = sld [smem:[#allocation0]]
  $region34: #{rnn_forward.1} parent=0
    _
  %s7 = ssub.s32 1, %s5
  %s8 = scalar_select 0, %s7, %s5
  $region1: #{rnn_forward.1} parent=0
    #allocation2 [shape = 'u8[65536]{0}', space=vmem, size = 0x10000, scoped, tag = 'input window, operand 1, single buffered']
    #allocation3 [shape = 's32[1]{0}', space=sflag, size = 0x4, scoped, tag = 'scoped memory for rnn_forward.1']
    #allocation4 [shape = 'u8[65536]{0}', space=vmem, size = 0x10000, scoped, tag = 'input window, operand 2, single buffered']
    #allocation5 [shape = 's32[1]{0}', space=sflag, size = 0x4, scoped, tag = 'scoped memory for rnn_forward.1']
    %9 = vsyncpa [#allocation3], 0
    %10 = vsyncpa [#allocation5], 0
    // Predicated region
    $region2: #{rnn_forward.1} parent=1 // pred_check
      _
    $region3: #{rnn_forward.1} parent=1 // pred_check_branch
      %12 = sbr.rel (0) target = $region5
    $region4: #{rnn_forward.1} parent=1 // pred_region
      _
    $region5: #{rnn_forward.1} parent=1 // pred_fallthru
      _
    // Predicated region
    $region6: #{rnn_forward.1} parent=1 // pred_check
      _
    $region7: #{rnn_forward.1} parent=1 // pred_check_branch
      %14 = sbr.rel (0) target = $region9
    $region8: #{rnn_forward.1} parent=1 // pred_region
      %s16 = ssub.s32 2048, 2048
      %17 = vsyncadd [#allocation3], %s16
      %s18 = sshll.u32 [#allocation2], 4
      %s19 = int_to_ptr.vmem [resolvable:$true] %s18
      %24 = dma.hbm_to_vmem [thread:$0]  %s1, 2048, %s19, [#allocation3], 128, 128, 8
    $region9: #{rnn_forward.1} parent=1 // pred_fallthru
      _
    // Predicated region
    $region10: #{rnn_forward.1} parent=1 // pred_check
      _
    $region11: #{rnn_forward.1} parent=1 // pred_check_branch
      %26 = sbr.rel (0) target = $region13
    $region12: #{rnn_forward.1} parent=1 // pred_region
      %s28 = ssub.s32 2048, 2048
      %29 = vsyncadd [#allocation5], %s28
      %s30 = sshll.u32 [#allocation4], 4
      %s31 = int_to_ptr.vmem [resolvable:$true] %s30
      %36 = dma.hbm_to_vmem [thread:$0]  %s2, 2048, %s31, [#allocation5], 128, 128, 8
    $region13: #{rnn_forward.1} parent=1 // pred_fallthru
      _
    // Predicated region
    $region14: #{rnn_forward.1} parent=1 // pred_check
      _
    $region15: #{rnn_forward.1} parent=1 // pred_check_branch
      %38 = sbr.rel (0) target = $region17
    $region16: #{rnn_forward.1} parent=1 // pred_region
      _
    $region17: #{rnn_forward.1} parent=1 // pred_fallthru
      _
    // Predicated region
    $region18: #{rnn_forward.1} parent=1 // pred_check
      _
    $region19: #{rnn_forward.1} parent=1 // pred_check_branch
      %40 = sbr.rel (0) target = $region21
    $region20: #{rnn_forward.1} parent=1 // pred_region
      %41 = dma.done [#allocation3], 2048
    $region21: #{rnn_forward.1} parent=1 // pred_fallthru
      _
    // Predicated region
    $region22: #{rnn_forward.1} parent=1 // pred_check
      _
    $region23: #{rnn_forward.1} parent=1 // pred_check_branch
      %43 = sbr.rel (0) target = $region25
    $region24: #{rnn_forward.1} parent=1 // pred_region
      %44 = dma.done [#allocation5], 2048
    $region25: #{rnn_forward.1} parent=1 // pred_fallthru
      _
    %v45 = vld [vmem:[%s0] sm:$0xff]
    %v46 = vld [vmem:[#allocation2] sm:$0xff]
    %v47 = vld [vmem:[#allocation2 + $0x8] sm:$0xff]
    %v48 = vld [vmem:[#allocation2 + $0x10] sm:$0xff]
    %v49 = vld [vmem:[#allocation2 + $0x18] sm:$0xff]
    %v50 = vld [vmem:[#allocation2 + $0x20] sm:$0xff]
    %v51 = vld [vmem:[#allocation2 + $0x28] sm:$0xff]
    %v52 = vld [vmem:[#allocation2 + $0x30] sm:$0xff]
    %v53 = vld [vmem:[#allocation2 + $0x38] sm:$0xff]
    %v54 = vld [vmem:[#allocation2 + $0x40] sm:$0xff]
    %v55 = vld [vmem:[#allocation2 + $0x48] sm:$0xff]
    %v56 = vld [vmem:[#allocation2 + $0x50] sm:$0xff]
    %v57 = vld [vmem:[#allocation2 + $0x58] sm:$0xff]
    %v58 = vld [vmem:[#allocation2 + $0x60] sm:$0xff]
    %v59 = vld [vmem:[#allocation2 + $0x68] sm:$0xff]
    %v60 = vld [vmem:[#allocation2 + $0x70] sm:$0xff]
    %v61 = vld [vmem:[#allocation2 + $0x78] sm:$0xff]
    %v62 = vld [vmem:[%s3] sm:$0x1]
    %v64 = vlaneseq
    %v65 = vshrl.u32 %v64, 7
    %v66 = vsub.s32 0, %v65
    %v67 = vrot.slane %v62, %v66
    %69 = vmatprep.subr.mxu0 0.0
    %70 = vmatpush1.msra.mxu0 %v46
    %71 = vmatprep.subr.mxu0 0.0
    %72 = vmatpush1.msra.mxu0 %v47
    %73 = vmatprep.subr.mxu0 0.0
    %74 = vmatpush1.msra.mxu0 %v48
    %75 = vmatprep.subr.mxu0 0.0
    %76 = vmatpush1.msra.mxu0 %v49
    %77 = vmatprep.subr.mxu0 0.0
    %78 = vmatpush1.msra.mxu0 %v50
    %79 = vmatprep.subr.mxu0 0.0
    %80 = vmatpush1.msra.mxu0 %v51
    %81 = vmatprep.subr.mxu0 0.0
    %82 = vmatpush1.msra.mxu0 %v52
    %83 = vmatprep.subr.mxu0 0.0
    %84 = vmatpush1.msra.mxu0 %v53
    %85 = vmatprep.subr.mxu0 0.0
    %86 = vmatpush1.msra.mxu0 %v54
    %87 = vmatprep.subr.mxu0 0.0
    %88 = vmatpush1.msra.mxu0 %v55
    %89 = vmatprep.subr.mxu0 0.0
    %90 = vmatpush1.msra.mxu0 %v56
    %91 = vmatprep.subr.mxu0 0.0
    %92 = vmatpush1.msra.mxu0 %v57
    %93 = vmatprep.subr.mxu0 0.0
    %94 = vmatpush1.msra.mxu0 %v58
    %95 = vmatprep.subr.mxu0 0.0
    %96 = vmatpush1.msra.mxu0 %v59
    %97 = vmatprep.subr.mxu0 0.0
    %98 = vmatpush1.msra.mxu0 %v60
    %99 = vmatprep.subr.mxu0 0.0
    %100 = vmatpush1.msra.mxu0 %v61
    %101 = vmatprep.subr.mxu0 0.0
    %102 = vmatpush1.msra.mxu0 0.0
    %103 = vmatprep.subr.mxu0 0.0
    %104 = vmatpush1.msra.mxu0 0.0
    %105 = vmatprep.subr.mxu0 0.0
    %106 = vmatpush1.msra.mxu0 0.0
    %107 = vmatprep.subr.mxu0 0.0
    %108 = vmatpush1.msra.mxu0 0.0
    %109 = vmatprep.subr.mxu0 0.0
    %110 = vmatpush1.msra.mxu0 0.0
    %111 = vmatprep.subr.mxu0 0.0
    %112 = vmatpush1.msra.mxu0 0.0
    %113 = vmatprep.subr.mxu0 0.0
    %114 = vmatpush1.msra.mxu0 0.0
    %115 = vmatprep.subr.mxu0 0.0
    %116 = vmatpush1.msra.mxu0 0.0
    %117 = vmatprep.subr.mxu0 0.0
    %118 = vmatpush1.msra.mxu0 0.0
    %119 = vmatprep.subr.mxu0 0.0
    %120 = vmatpush1.msra.mxu0 0.0
    %121 = vmatprep.subr.mxu0 0.0
    %122 = vmatpush1.msra.mxu0 0.0
    %123 = vmatprep.subr.mxu0 0.0
    %124 = vmatpush1.msra.mxu0 0.0
    %125 = vmatprep.subr.mxu0 0.0
    %126 = vmatpush1.msra.mxu0 0.0
    %127 = vmatprep.subr.mxu0 0.0
    %128 = vmatpush1.msra.mxu0 0.0
    %129 = vmatprep.subr.mxu0 0.0
    %130 = vmatpush1.msra.mxu0 0.0
    %131 = vmatprep.subr.mxu0 0.0
    %132 = vmatpush1.msra.mxu0 0.0
    %133 = vmatprep.mubr.f32.mxu0 0.0
    %134 = vmatmul.mubr.f32.gmra.mrb[0].mxu0 %v45
    %v135 = vpop.f32.mrb[0].mxu0
    %v136 = vadd.f32 %v67, %v135
    %v137 = vpop.f32.mrb[0].mxu0
    %138 = vdwg.mxu0
    %v139 = vld [vmem:[#allocation4] sm:$0xff]
    %v140 = vld [vmem:[#allocation4 + $0x8] sm:$0xff]
    %v141 = vld [vmem:[#allocation4 + $0x10] sm:$0xff]
    %v142 = vld [vmem:[#allocation4 + $0x18] sm:$0xff]
    %v143 = vld [vmem:[#allocation4 + $0x20] sm:$0xff]
    %v144 = vld [vmem:[#allocation4 + $0x28] sm:$0xff]
    %v145 = vld [vmem:[#allocation4 + $0x30] sm:$0xff]
    %v146 = vld [vmem:[#allocation4 + $0x38] sm:$0xff]
    %v147 = vld [vmem:[#allocation4 + $0x40] sm:$0xff]
    %v148 = vld [vmem:[#allocation4 + $0x48] sm:$0xff]
    %v149 = vld [vmem:[#allocation4 + $0x50] sm:$0xff]
    %v150 = vld [vmem:[#allocation4 + $0x58] sm:$0xff]
    %v151 = vld [vmem:[#allocation4 + $0x60] sm:$0xff]
    %v152 = vld [vmem:[#allocation4 + $0x68] sm:$0xff]
    %v153 = vld [vmem:[#allocation4 + $0x70] sm:$0xff]
    %v154 = vld [vmem:[#allocation4 + $0x78] sm:$0xff]
    %155 = vmatprep.subr.mxu0 0.0
    %156 = vmatpush1.msra.mxu0 %v139
    %157 = vmatprep.subr.mxu0 0.0
    %158 = vmatpush1.msra.mxu0 %v140
    %159 = vmatprep.subr.mxu0 0.0
    %160 = vmatpush1.msra.mxu0 %v141
    %161 = vmatprep.subr.mxu0 0.0
    %162 = vmatpush1.msra.mxu0 %v142
    %163 = vmatprep.subr.mxu0 0.0
    %164 = vmatpush1.msra.mxu0 %v143
    %165 = vmatprep.subr.mxu0 0.0
    %166 = vmatpush1.msra.mxu0 %v144
    %167 = vmatprep.subr.mxu0 0.0
    %168 = vmatpush1.msra.mxu0 %v145
    %169 = vmatprep.subr.mxu0 0.0
    %170 = vmatpush1.msra.mxu0 %v146
    %171 = vmatprep.subr.mxu0 0.0
    %172 = vmatpush1.msra.mxu0 %v147
    %173 = vmatprep.subr.mxu0 0.0
    %174 = vmatpush1.msra.mxu0 %v148
    %175 = vmatprep.subr.mxu0 0.0
    %176 = vmatpush1.msra.mxu0 %v149
    %177 = vmatprep.subr.mxu0 0.0
    %178 = vmatpush1.msra.mxu0 %v150
    %179 = vmatprep.subr.mxu0 0.0
    %180 = vmatpush1.msra.mxu0 %v151
    %181 = vmatprep.subr.mxu0 0.0
    %182 = vmatpush1.msra.mxu0 %v152
    %183 = vmatprep.subr.mxu0 0.0
    %184 = vmatpush1.msra.mxu0 %v153
    %185 = vmatprep.subr.mxu0 0.0
    %186 = vmatpush1.msra.mxu0 %v154
    %187 = vmatprep.subr.mxu0 0.0
    %188 = vmatpush1.msra.mxu0 0.0
    %189 = vmatprep.subr.mxu0 0.0
    %190 = vmatpush1.msra.mxu0 0.0
    %191 = vmatprep.subr.mxu0 0.0
    %192 = vmatpush1.msra.mxu0 0.0
    %193 = vmatprep.subr.mxu0 0.0
    %194 = vmatpush1.msra.mxu0 0.0
    %195 = vmatprep.subr.mxu0 0.0
    %196 = vmatpush1.msra.mxu0 0.0
    %197 = vmatprep.subr.mxu0 0.0
    %198 = vmatpush1.msra.mxu0 0.0
    %199 = vmatprep.subr.mxu0 0.0
    %200 = vmatpush1.msra.mxu0 0.0
    %201 = vmatprep.subr.mxu0 0.0
    %202 = vmatpush1.msra.mxu0 0.0
    %203 = vmatprep.subr.mxu0 0.0
    %204 = vmatpush1.msra.mxu0 0.0
    %205 = vmatprep.subr.mxu0 0.0
    %206 = vmatpush1.msra.mxu0 0.0
    %207 = vmatprep.subr.mxu0 0.0
    %208 = vmatpush1.msra.mxu0 0.0
    %209 = vmatprep.subr.mxu0 0.0
    %210 = vmatpush1.msra.mxu0 0.0
    %211 = vmatprep.subr.mxu0 0.0
    %212 = vmatpush1.msra.mxu0 0.0
    %213 = vmatprep.subr.mxu0 0.0
    %214 = vmatpush1.msra.mxu0 0.0
    %215 = vmatprep.subr.mxu0 0.0
    %216 = vmatpush1.msra.mxu0 0.0
    %217 = vmatprep.subr.mxu0 0.0
    %218 = vmatpush1.msra.mxu0 0.0
    %219 = vmatprep.mubr.f32.mxu0 0.0
    %220 = vmatmul.mubr.f32.gmra.mrb[0].mxu0 0.0
    %v221 = vpop.f32.mrb[0].mxu0
    %v222 = vadd.f32 0.0, %v221
    %v223 = vpop.f32.mrb[0].mxu0
    %224 = vdwg.mxu0
    %v225 = vadd.f32 %v136, %v222
    %v226 = vtanh.pop %v225
    %227 = vmatprep.subr.mxu0 0.0
    %228 = vmatpush1.msra.mxu0 %v139
    %229 = vmatprep.subr.mxu0 0.0
    %230 = vmatpush1.msra.mxu0 %v140
    %231 = vmatprep.subr.mxu0 0.0
    %232 = vmatpush1.msra.mxu0 %v141
    %233 = vmatprep.subr.mxu0 0.0
    %234 = vmatpush1.msra.mxu0 %v142
    %235 = vmatprep.subr.mxu0 0.0
    %236 = vmatpush1.msra.mxu0 %v143
    %237 = vmatprep.subr.mxu0 0.0
    %238 = vmatpush1.msra.mxu0 %v144
    %239 = vmatprep.subr.mxu0 0.0
    %240 = vmatpush1.msra.mxu0 %v145
    %241 = vmatprep.subr.mxu0 0.0
    %242 = vmatpush1.msra.mxu0 %v146
    %243 = vmatprep.subr.mxu0 0.0
    %244 = vmatpush1.msra.mxu0 %v147
    %245 = vmatprep.subr.mxu0 0.0
    %246 = vmatpush1.msra.mxu0 %v148
    %247 = vmatprep.subr.mxu0 0.0
    %248 = vmatpush1.msra.mxu0 %v149
    %249 = vmatprep.subr.mxu0 0.0
    %250 = vmatpush1.msra.mxu0 %v150
    %251 = vmatprep.subr.mxu0 0.0
    %252 = vmatpush1.msra.mxu0 %v151
    %253 = vmatprep.subr.mxu0 0.0
    %254 = vmatpush1.msra.mxu0 %v152
    %255 = vmatprep.subr.mxu0 0.0
    %256 = vmatpush1.msra.mxu0 %v153
    %257 = vmatprep.subr.mxu0 0.0
    %258 = vmatpush1.msra.mxu0 %v154
    %259 = vmatprep.subr.mxu0 0.0
    %260 = vmatpush1.msra.mxu0 0.0
    %261 = vmatprep.subr.mxu0 0.0
    %262 = vmatpush1.msra.mxu0 0.0
    %263 = vmatprep.subr.mxu0 0.0
    %264 = vmatpush1.msra.mxu0 0.0
    %265 = vmatprep.subr.mxu0 0.0
    %266 = vmatpush1.msra.mxu0 0.0
    %267 = vmatprep.subr.mxu0 0.0
    %268 = vmatpush1.msra.mxu0 0.0
    %269 = vmatprep.subr.mxu0 0.0
    %270 = vmatpush1.msra.mxu0 0.0
    %271 = vmatprep.subr.mxu0 0.0
    %272 = vmatpush1.msra.mxu0 0.0
    %273 = vmatprep.subr.mxu0 0.0
    %274 = vmatpush1.msra.mxu0 0.0
    %275 = vmatprep.subr.mxu0 0.0
    %276 = vmatpush1.msra.mxu0 0.0
    %277 = vmatprep.subr.mxu0 0.0
    %278 = vmatpush1.msra.mxu0 0.0
    %279 = vmatprep.subr.mxu0 0.0
    %280 = vmatpush1.msra.mxu0 0.0
    %281 = vmatprep.subr.mxu0 0.0
    %282 = vmatpush1.msra.mxu0 0.0
    %283 = vmatprep.subr.mxu0 0.0
    %284 = vmatpush1.msra.mxu0 0.0
    %285 = vmatprep.subr.mxu0 0.0
    %286 = vmatpush1.msra.mxu0 0.0
    %287 = vmatprep.subr.mxu0 0.0
    %288 = vmatpush1.msra.mxu0 0.0
    %289 = vmatprep.subr.mxu0 0.0
    %290 = vmatpush1.msra.mxu0 0.0
    %291 = vmatprep.mubr.f32.mxu0 0.0
    %292 = vmatmul.mubr.f32.gmra.mrb[0].mxu0 %v226
    %v293 = vpop.f32.mrb[0].mxu0
    %v294 = vadd.f32 0.0, %v293
    %v295 = vpop.f32.mrb[0].mxu0
    %296 = vdwg.mxu0
    %v298 = vrot.slane %v294, 7
    %v300 = vadd.f32 %v136, %v298
    %v301 = vtanh.pop %v300
    %v303 = vrot.slane %v301, 1
    %305 = vmatprep.subr.mxu0 0.0
    %306 = vmatpush1.msra.mxu0 %v139
    %307 = vmatprep.subr.mxu0 0.0
    %308 = vmatpush1.msra.mxu0 %v140
    %309 = vmatprep.subr.mxu0 0.0
    %310 = vmatpush1.msra.mxu0 %v141
    %311 = vmatprep.subr.mxu0 0.0
    %312 = vmatpush1.msra.mxu0 %v142
    %313 = vmatprep.subr.mxu0 0.0
    %314 = vmatpush1.msra.mxu0 %v143
    %315 = vmatprep.subr.mxu0 0.0
    %316 = vmatpush1.msra.mxu0 %v144
    %317 = vmatprep.subr.mxu0 0.0
    %318 = vmatpush1.msra.mxu0 %v145
    %319 = vmatprep.subr.mxu0 0.0
    %320 = vmatpush1.msra.mxu0 %v146
    %321 = vmatprep.subr.mxu0 0.0
    %322 = vmatpush1.msra.mxu0 %v147
    %323 = vmatprep.subr.mxu0 0.0
    %324 = vmatpush1.msra.mxu0 %v148
    %325 = vmatprep.subr.mxu0 0.0
    %326 = vmatpush1.msra.mxu0 %v149
    %327 = vmatprep.subr.mxu0 0.0
    %328 = vmatpush1.msra.mxu0 %v150
    %329 = vmatprep.subr.mxu0 0.0
    %330 = vmatpush1.msra.mxu0 %v151
    %331 = vmatprep.subr.mxu0 0.0
    %332 = vmatpush1.msra.mxu0 %v152
    %333 = vmatprep.subr.mxu0 0.0
    %334 = vmatpush1.msra.mxu0 %v153
    %335 = vmatprep.subr.mxu0 0.0
    %336 = vmatpush1.msra.mxu0 %v154
    %337 = vmatprep.subr.mxu0 0.0
    %338 = vmatpush1.msra.mxu0 0.0
    %339 = vmatprep.subr.mxu0 0.0
    %340 = vmatpush1.msra.mxu0 0.0
    %341 = vmatprep.subr.mxu0 0.0
    %342 = vmatpush1.msra.mxu0 0.0
    %343 = vmatprep.subr.mxu0 0.0
    %344 = vmatpush1.msra.mxu0 0.0
    %345 = vmatprep.subr.mxu0 0.0
    %346 = vmatpush1.msra.mxu0 0.0
    %347 = vmatprep.subr.mxu0 0.0
    %348 = vmatpush1.msra.mxu0 0.0
    %349 = vmatprep.subr.mxu0 0.0
    %350 = vmatpush1.msra.mxu0 0.0
    %351 = vmatprep.subr.mxu0 0.0
    %352 = vmatpush1.msra.mxu0 0.0
    %353 = vmatprep.subr.mxu0 0.0
    %354 = vmatpush1.msra.mxu0 0.0
    %355 = vmatprep.subr.mxu0 0.0
    %356 = vmatpush1.msra.mxu0 0.0
    %357 = vmatprep.subr.mxu0 0.0
    %358 = vmatpush1.msra.mxu0 0.0
    %359 = vmatprep.subr.mxu0 0.0
    %360 = vmatpush1.msra.mxu0 0.0
    %361 = vmatprep.subr.mxu0 0.0
    %362 = vmatpush1.msra.mxu0 0.0
    %363 = vmatprep.subr.mxu0 0.0
    %364 = vmatpush1.msra.mxu0 0.0
    %365 = vmatprep.subr.mxu0 0.0
    %366 = vmatpush1.msra.mxu0 0.0
    %367 = vmatprep.subr.mxu0 0.0
    %368 = vmatpush1.msra.mxu0 0.0
    %369 = vmatprep.mubr.f32.mxu0 0.0
    %370 = vmatmul.mubr.f32.gmra.mrb[0].mxu0 %v303
    %v371 = vpop.f32.mrb[0].mxu0
    %v372 = vadd.f32 0.0, %v371
    %v373 = vpop.f32.mrb[0].mxu0
    %374 = vdwg.mxu0
    %v376 = vrot.slane %v372, 6
    %v378 = vadd.f32 %v136, %v376
    %v379 = vtanh.pop %v378
    %v381 = vrot.slane %v379, 2
    %383 = vmatprep.subr.mxu0 0.0
    %384 = vmatpush1.msra.mxu0 %v139
    %385 = vmatprep.subr.mxu0 0.0
    %386 = vmatpush1.msra.mxu0 %v140
    %387 = vmatprep.subr.mxu0 0.0
    %388 = vmatpush1.msra.mxu0 %v141
    %389 = vmatprep.subr.mxu0 0.0
    %390 = vmatpush1.msra.mxu0 %v142
    %391 = vmatprep.subr.mxu0 0.0
    %392 = vmatpush1.msra.mxu0 %v143
    %393 = vmatprep.subr.mxu0 0.0
    %394 = vmatpush1.msra.mxu0 %v144
    %395 = vmatprep.subr.mxu0 0.0
    %396 = vmatpush1.msra.mxu0 %v145
    %397 = vmatprep.subr.mxu0 0.0
    %398 = vmatpush1.msra.mxu0 %v146
    %399 = vmatprep.subr.mxu0 0.0
    %400 = vmatpush1.msra.mxu0 %v147
    %401 = vmatprep.subr.mxu0 0.0
    %402 = vmatpush1.msra.mxu0 %v148
    %403 = vmatprep.subr.mxu0 0.0
    %404 = vmatpush1.msra.mxu0 %v149
    %405 = vmatprep.subr.mxu0 0.0
    %406 = vmatpush1.msra.mxu0 %v150
    %407 = vmatprep.subr.mxu0 0.0
    %408 = vmatpush1.msra.mxu0 %v151
    %409 = vmatprep.subr.mxu0 0.0
    %410 = vmatpush1.msra.mxu0 %v152
    %411 = vmatprep.subr.mxu0 0.0
    %412 = vmatpush1.msra.mxu0 %v153
    %413 = vmatprep.subr.mxu0 0.0
    %414 = vmatpush1.msra.mxu0 %v154
    %415 = vmatprep.subr.mxu0 0.0
    %416 = vmatpush1.msra.mxu0 0.0
    %417 = vmatprep.subr.mxu0 0.0
    %418 = vmatpush1.msra.mxu0 0.0
    %419 = vmatprep.subr.mxu0 0.0
    %420 = vmatpush1.msra.mxu0 0.0
    %421 = vmatprep.subr.mxu0 0.0
    %422 = vmatpush1.msra.mxu0 0.0
    %423 = vmatprep.subr.mxu0 0.0
    %424 = vmatpush1.msra.mxu0 0.0
    %425 = vmatprep.subr.mxu0 0.0
    %426 = vmatpush1.msra.mxu0 0.0
    %427 = vmatprep.subr.mxu0 0.0
    %428 = vmatpush1.msra.mxu0 0.0
    %429 = vmatprep.subr.mxu0 0.0
    %430 = vmatpush1.msra.mxu0 0.0
    %431 = vmatprep.subr.mxu0 0.0
    %432 = vmatpush1.msra.mxu0 0.0
    %433 = vmatprep.subr.mxu0 0.0
    %434 = vmatpush1.msra.mxu0 0.0
    %435 = vmatprep.subr.mxu0 0.0
    %436 = vmatpush1.msra.mxu0 0.0
    %437 = vmatprep.subr.mxu0 0.0
    %438 = vmatpush1.msra.mxu0 0.0
    %439 = vmatprep.subr.mxu0 0.0
    %440 = vmatpush1.msra.mxu0 0.0
    %441 = vmatprep.subr.mxu0 0.0
    %442 = vmatpush1.msra.mxu0 0.0
    %443 = vmatprep.subr.mxu0 0.0
    %444 = vmatpush1.msra.mxu0 0.0
    %445 = vmatprep.subr.mxu0 0.0
    %446 = vmatpush1.msra.mxu0 0.0
    %447 = vmatprep.mubr.f32.mxu0 0.0
    %448 = vmatmul.mubr.f32.gmra.mrb[0].mxu0 %v381
    %v449 = vpop.f32.mrb[0].mxu0
    %v450 = vadd.f32 0.0, %v449
    %v451 = vpop.f32.mrb[0].mxu0
    %452 = vdwg.mxu0
    %v454 = vrot.slane %v450, 5
    %v456 = vadd.f32 %v136, %v454
    %v457 = vtanh.pop %v456
    %v459 = vrot.slane %v457, 3
    %461 = vmatprep.subr.mxu0 0.0
    %462 = vmatpush1.msra.mxu0 %v139
    %463 = vmatprep.subr.mxu0 0.0
    %464 = vmatpush1.msra.mxu0 %v140
    %465 = vmatprep.subr.mxu0 0.0
    %466 = vmatpush1.msra.mxu0 %v141
    %467 = vmatprep.subr.mxu0 0.0
    %468 = vmatpush1.msra.mxu0 %v142
    %469 = vmatprep.subr.mxu0 0.0
    %470 = vmatpush1.msra.mxu0 %v143
    %471 = vmatprep.subr.mxu0 0.0
    %472 = vmatpush1.msra.mxu0 %v144
    %473 = vmatprep.subr.mxu0 0.0
    %474 = vmatpush1.msra.mxu0 %v145
    %475 = vmatprep.subr.mxu0 0.0
    %476 = vmatpush1.msra.mxu0 %v146
    %477 = vmatprep.subr.mxu0 0.0
    %478 = vmatpush1.msra.mxu0 %v147
    %479 = vmatprep.subr.mxu0 0.0
    %480 = vmatpush1.msra.mxu0 %v148
    %481 = vmatprep.subr.mxu0 0.0
    %482 = vmatpush1.msra.mxu0 %v149
    %483 = vmatprep.subr.mxu0 0.0
    %484 = vmatpush1.msra.mxu0 %v150
    %485 = vmatprep.subr.mxu0 0.0
    %486 = vmatpush1.msra.mxu0 %v151
    %487 = vmatprep.subr.mxu0 0.0
    %488 = vmatpush1.msra.mxu0 %v152
    %489 = vmatprep.subr.mxu0 0.0
    %490 = vmatpush1.msra.mxu0 %v153
    %491 = vmatprep.subr.mxu0 0.0
    %492 = vmatpush1.msra.mxu0 %v154
    %493 = vmatprep.subr.mxu0 0.0
    %494 = vmatpush1.msra.mxu0 0.0
    %495 = vmatprep.subr.mxu0 0.0
    %496 = vmatpush1.msra.mxu0 0.0
    %497 = vmatprep.subr.mxu0 0.0
    %498 = vmatpush1.msra.mxu0 0.0
    %499 = vmatprep.subr.mxu0 0.0
    %500 = vmatpush1.msra.mxu0 0.0
    %501 = vmatprep.subr.mxu0 0.0
    %502 = vmatpush1.msra.mxu0 0.0
    %503 = vmatprep.subr.mxu0 0.0
    %504 = vmatpush1.msra.mxu0 0.0
    %505 = vmatprep.subr.mxu0 0.0
    %506 = vmatpush1.msra.mxu0 0.0
    %507 = vmatprep.subr.mxu0 0.0
    %508 = vmatpush1.msra.mxu0 0.0
    %509 = vmatprep.subr.mxu0 0.0
    %510 = vmatpush1.msra.mxu0 0.0
    %511 = vmatprep.subr.mxu0 0.0
    %512 = vmatpush1.msra.mxu0 0.0
    %513 = vmatprep.subr.mxu0 0.0
    %514 = vmatpush1.msra.mxu0 0.0
    %515 = vmatprep.subr.mxu0 0.0
    %516 = vmatpush1.msra.mxu0 0.0
    %517 = vmatprep.subr.mxu0 0.0
    %518 = vmatpush1.msra.mxu0 0.0
    %519 = vmatprep.subr.mxu0 0.0
    %520 = vmatpush1.msra.mxu0 0.0
    %521 = vmatprep.subr.mxu0 0.0
    %522 = vmatpush1.msra.mxu0 0.0
    %523 = vmatprep.subr.mxu0 0.0
    %524 = vmatpush1.msra.mxu0 0.0
    %525 = vmatprep.mubr.f32.mxu0 0.0
    %526 = vmatmul.mubr.f32.gmra.mrb[0].mxu0 %v459
    %v527 = vpop.f32.mrb[0].mxu0
    %v528 = vadd.f32 0.0, %v527
    %v529 = vpop.f32.mrb[0].mxu0
    %530 = vdwg.mxu0
    %v532 = vrot.slane %v528, 4
    %v534 = vadd.f32 %v136, %v532
    %v535 = vtanh.pop %v534
    %v537 = vrot.slane %v535, 4
    %539 = vmatprep.subr.mxu0 0.0
    %540 = vmatpush1.msra.mxu0 %v139
    %541 = vmatprep.subr.mxu0 0.0
    %542 = vmatpush1.msra.mxu0 %v140
    %543 = vmatprep.subr.mxu0 0.0
    %544 = vmatpush1.msra.mxu0 %v141
    %545 = vmatprep.subr.mxu0 0.0
    %546 = vmatpush1.msra.mxu0 %v142
    %547 = vmatprep.subr.mxu0 0.0
    %548 = vmatpush1.msra.mxu0 %v143
    %549 = vmatprep.subr.mxu0 0.0
    %550 = vmatpush1.msra.mxu0 %v144
    %551 = vmatprep.subr.mxu0 0.0
    %552 = vmatpush1.msra.mxu0 %v145
    %553 = vmatprep.subr.mxu0 0.0
    %554 = vmatpush1.msra.mxu0 %v146
    %555 = vmatprep.subr.mxu0 0.0
    %556 = vmatpush1.msra.mxu0 %v147
    %557 = vmatprep.subr.mxu0 0.0
    %558 = vmatpush1.msra.mxu0 %v148
    %559 = vmatprep.subr.mxu0 0.0
    %560 = vmatpush1.msra.mxu0 %v149
    %561 = vmatprep.subr.mxu0 0.0
    %562 = vmatpush1.msra.mxu0 %v150
    %563 = vmatprep.subr.mxu0 0.0
    %564 = vmatpush1.msra.mxu0 %v151
    %565 = vmatprep.subr.mxu0 0.0
    %566 = vmatpush1.msra.mxu0 %v152
    %567 = vmatprep.subr.mxu0 0.0
    %568 = vmatpush1.msra.mxu0 %v153
    %569 = vmatprep.subr.mxu0 0.0
    %570 = vmatpush1.msra.mxu0 %v154
    %571 = vmatprep.subr.mxu0 0.0
    %572 = vmatpush1.msra.mxu0 0.0
    %573 = vmatprep.subr.mxu0 0.0
    %574 = vmatpush1.msra.mxu0 0.0
    %575 = vmatprep.subr.mxu0 0.0
    %576 = vmatpush1.msra.mxu0 0.0
    %577 = vmatprep.subr.mxu0 0.0
    %578 = vmatpush1.msra.mxu0 0.0
    %579 = vmatprep.subr.mxu0 0.0
    %580 = vmatpush1.msra.mxu0 0.0
    %581 = vmatprep.subr.mxu0 0.0
    %582 = vmatpush1.msra.mxu0 0.0
    %583 = vmatprep.subr.mxu0 0.0
    %584 = vmatpush1.msra.mxu0 0.0
    %585 = vmatprep.subr.mxu0 0.0
    %586 = vmatpush1.msra.mxu0 0.0
    %587 = vmatprep.subr.mxu0 0.0
    %588 = vmatpush1.msra.mxu0 0.0
    %589 = vmatprep.subr.mxu0 0.0
    %590 = vmatpush1.msra.mxu0 0.0
    %591 = vmatprep.subr.mxu0 0.0
    %592 = vmatpush1.msra.mxu0 0.0
    %593 = vmatprep.subr.mxu0 0.0
    %594 = vmatpush1.msra.mxu0 0.0
    %595 = vmatprep.subr.mxu0 0.0
    %596 = vmatpush1.msra.mxu0 0.0
    %597 = vmatprep.subr.mxu0 0.0
    %598 = vmatpush1.msra.mxu0 0.0
    %599 = vmatprep.subr.mxu0 0.0
    %600 = vmatpush1.msra.mxu0 0.0
    %601 = vmatprep.subr.mxu0 0.0
    %602 = vmatpush1.msra.mxu0 0.0
    %603 = vmatprep.mubr.f32.mxu0 0.0
    %604 = vmatmul.mubr.f32.gmra.mrb[0].mxu0 %v537
    %v605 = vpop.f32.mrb[0].mxu0
    %v606 = vadd.f32 0.0, %v605
    %v607 = vpop.f32.mrb[0].mxu0
    %608 = vdwg.mxu0
    %v610 = vrot.slane %v606, 3
    %v612 = vadd.f32 %v136, %v610
    %v613 = vtanh.pop %v612
    %v615 = vrot.slane %v613, 5
    %617 = vmatprep.subr.mxu0 0.0
    %618 = vmatpush1.msra.mxu0 %v139
    %619 = vmatprep.subr.mxu0 0.0
    %620 = vmatpush1.msra.mxu0 %v140
    %621 = vmatprep.subr.mxu0 0.0
    %622 = vmatpush1.msra.mxu0 %v141
    %623 = vmatprep.subr.mxu0 0.0
    %624 = vmatpush1.msra.mxu0 %v142
    %625 = vmatprep.subr.mxu0 0.0
    %626 = vmatpush1.msra.mxu0 %v143
    %627 = vmatprep.subr.mxu0 0.0
    %628 = vmatpush1.msra.mxu0 %v144
    %629 = vmatprep.subr.mxu0 0.0
    %630 = vmatpush1.msra.mxu0 %v145
    %631 = vmatprep.subr.mxu0 0.0
    %632 = vmatpush1.msra.mxu0 %v146
    %633 = vmatprep.subr.mxu0 0.0
    %634 = vmatpush1.msra.mxu0 %v147
    %635 = vmatprep.subr.mxu0 0.0
    %636 = vmatpush1.msra.mxu0 %v148
    %637 = vmatprep.subr.mxu0 0.0
    %638 = vmatpush1.msra.mxu0 %v149
    %639 = vmatprep.subr.mxu0 0.0
    %640 = vmatpush1.msra.mxu0 %v150
    %641 = vmatprep.subr.mxu0 0.0
    %642 = vmatpush1.msra.mxu0 %v151
    %643 = vmatprep.subr.mxu0 0.0
    %644 = vmatpush1.msra.mxu0 %v152
    %645 = vmatprep.subr.mxu0 0.0
    %646 = vmatpush1.msra.mxu0 %v153
    %647 = vmatprep.subr.mxu0 0.0
    %648 = vmatpush1.msra.mxu0 %v154
    %649 = vmatprep.subr.mxu0 0.0
    %650 = vmatpush1.msra.mxu0 0.0
    %651 = vmatprep.subr.mxu0 0.0
    %652 = vmatpush1.msra.mxu0 0.0
    %653 = vmatprep.subr.mxu0 0.0
    %654 = vmatpush1.msra.mxu0 0.0
    %655 = vmatprep.subr.mxu0 0.0
    %656 = vmatpush1.msra.mxu0 0.0
    %657 = vmatprep.subr.mxu0 0.0
    %658 = vmatpush1.msra.mxu0 0.0
    %659 = vmatprep.subr.mxu0 0.0
    %660 = vmatpush1.msra.mxu0 0.0
    %661 = vmatprep.subr.mxu0 0.0
    %662 = vmatpush1.msra.mxu0 0.0
    %663 = vmatprep.subr.mxu0 0.0
    %664 = vmatpush1.msra.mxu0 0.0
    %665 = vmatprep.subr.mxu0 0.0
    %666 = vmatpush1.msra.mxu0 0.0
    %667 = vmatprep.subr.mxu0 0.0
    %668 = vmatpush1.msra.mxu0 0.0
    %669 = vmatprep.subr.mxu0 0.0
    %670 = vmatpush1.msra.mxu0 0.0
    %671 = vmatprep.subr.mxu0 0.0
    %672 = vmatpush1.msra.mxu0 0.0
    %673 = vmatprep.subr.mxu0 0.0
    %674 = vmatpush1.msra.mxu0 0.0
    %675 = vmatprep.subr.mxu0 0.0
    %676 = vmatpush1.msra.mxu0 0.0
    %677 = vmatprep.subr.mxu0 0.0
    %678 = vmatpush1.msra.mxu0 0.0
    %679 = vmatprep.subr.mxu0 0.0
    %680 = vmatpush1.msra.mxu0 0.0
    %681 = vmatprep.mubr.f32.mxu0 0.0
    %682 = vmatmul.mubr.f32.gmra.mrb[0].mxu0 %v615
    %v683 = vpop.f32.mrb[0].mxu0
    %v684 = vadd.f32 0.0, %v683
    %v685 = vpop.f32.mrb[0].mxu0
    %686 = vdwg.mxu0
    %v688 = vrot.slane %v684, 2
    %v690 = vadd.f32 %v136, %v688
    %v691 = vtanh.pop %v690
    %v693 = vrot.slane %v691, 6
    %695 = vmatprep.subr.mxu0 0.0
    %696 = vmatpush1.msra.mxu0 %v139
    %697 = vmatprep.subr.mxu0 0.0
    %698 = vmatpush1.msra.mxu0 %v140
    %699 = vmatprep.subr.mxu0 0.0
    %700 = vmatpush1.msra.mxu0 %v141
    %701 = vmatprep.subr.mxu0 0.0
    %702 = vmatpush1.msra.mxu0 %v142
    %703 = vmatprep.subr.mxu0 0.0
    %704 = vmatpush1.msra.mxu0 %v143
    %705 = vmatprep.subr.mxu0 0.0
    %706 = vmatpush1.msra.mxu0 %v144
    %707 = vmatprep.subr.mxu0 0.0
    %708 = vmatpush1.msra.mxu0 %v145
    %709 = vmatprep.subr.mxu0 0.0
    %710 = vmatpush1.msra.mxu0 %v146
    %711 = vmatprep.subr.mxu0 0.0
    %712 = vmatpush1.msra.mxu0 %v147
    %713 = vmatprep.subr.mxu0 0.0
    %714 = vmatpush1.msra.mxu0 %v148
    %715 = vmatprep.subr.mxu0 0.0
    %716 = vmatpush1.msra.mxu0 %v149
    %717 = vmatprep.subr.mxu0 0.0
    %718 = vmatpush1.msra.mxu0 %v150
    %719 = vmatprep.subr.mxu0 0.0
    %720 = vmatpush1.msra.mxu0 %v151
    %721 = vmatprep.subr.mxu0 0.0
    %722 = vmatpush1.msra.mxu0 %v152
    %723 = vmatprep.subr.mxu0 0.0
    %724 = vmatpush1.msra.mxu0 %v153
    %725 = vmatprep.subr.mxu0 0.0
    %726 = vmatpush1.msra.mxu0 %v154
    %727 = vmatprep.subr.mxu0 0.0
    %728 = vmatpush1.msra.mxu0 0.0
    %729 = vmatprep.subr.mxu0 0.0
    %730 = vmatpush1.msra.mxu0 0.0
    %731 = vmatprep.subr.mxu0 0.0
    %732 = vmatpush1.msra.mxu0 0.0
    %733 = vmatprep.subr.mxu0 0.0
    %734 = vmatpush1.msra.mxu0 0.0
    %735 = vmatprep.subr.mxu0 0.0
    %736 = vmatpush1.msra.mxu0 0.0
    %737 = vmatprep.subr.mxu0 0.0
    %738 = vmatpush1.msra.mxu0 0.0
    %739 = vmatprep.subr.mxu0 0.0
    %740 = vmatpush1.msra.mxu0 0.0
    %741 = vmatprep.subr.mxu0 0.0
    %742 = vmatpush1.msra.mxu0 0.0
    %743 = vmatprep.subr.mxu0 0.0
    %744 = vmatpush1.msra.mxu0 0.0
    %745 = vmatprep.subr.mxu0 0.0
    %746 = vmatpush1.msra.mxu0 0.0
    %747 = vmatprep.subr.mxu0 0.0
    %748 = vmatpush1.msra.mxu0 0.0
    %749 = vmatprep.subr.mxu0 0.0
    %750 = vmatpush1.msra.mxu0 0.0
    %751 = vmatprep.subr.mxu0 0.0
    %752 = vmatpush1.msra.mxu0 0.0
    %753 = vmatprep.subr.mxu0 0.0
    %754 = vmatpush1.msra.mxu0 0.0
    %755 = vmatprep.subr.mxu0 0.0
    %756 = vmatpush1.msra.mxu0 0.0
    %757 = vmatprep.subr.mxu0 0.0
    %758 = vmatpush1.msra.mxu0 0.0
    %759 = vmatprep.mubr.f32.mxu0 0.0
    %760 = vmatmul.mubr.f32.gmra.mrb[0].mxu0 %v693
    %v761 = vpop.f32.mrb[0].mxu0
    %v762 = vadd.f32 0.0, %v761
    %v763 = vpop.f32.mrb[0].mxu0
    %764 = vdwg.mxu0
    %v766 = vrot.slane %v762, 1
    %v768 = vadd.f32 %v136, %v766
    %v769 = vtanh.pop %v768
    %vm770 = vcmask 1040384
    %v771 = vsel %vm770, %v226, %v301
    %vm772 = vcmask 1041408
    %v773 = vsel %vm772, %v771, %v379
    %vm774 = vcmask 1042432
    %v775 = vsel %vm774, %v773, %v457
    %vm776 = vcmask 1043456
    %v777 = vsel %vm776, %v775, %v535
    %vm778 = vcmask 1044480
    %v779 = vsel %vm778, %v777, %v613
    %vm780 = vcmask 1045504
    %v781 = vsel %vm780, %v779, %v691
    %vm782 = vcmask 1046528
    %v783 = vsel %vm782, %v781, %v769
    %784 = vst [vmem:[%s4] sm:$0xff] %v783
    // Predicated region
    $region26: #{rnn_forward.1} parent=1 // pred_check
      _
    $region27: #{rnn_forward.1} parent=1 // pred_check_branch
      %786 = sbr.rel (0) target = $region29
    $region28: #{rnn_forward.1} parent=1 // pred_region
      _
    $region29: #{rnn_forward.1} parent=1 // pred_fallthru
      _
    // Predicated region
    $region30: #{rnn_forward.1} parent=1 // pred_check
      _
    $region31: #{rnn_forward.1} parent=1 // pred_check_branch
      %788 = sbr.rel (0) target = $region33
    $region32: #{rnn_forward.1} parent=1 // pred_region
      _
    $region33: #{rnn_forward.1} parent=1 // pred_fallthru
      _
    %789 = vsyncpa [#allocation3], 1
    %790 = vsyncpa [#allocation5], 1

</llo_original>
